<compile_context>
chip_gen: v7x
topology: tpu7x:2x2x1
jax: 0.10.0
libtpu: 0.0.40
codegen_flags: <defaults>
</compile_context>

<pallas_src>
import functools
import math

import jax
import jax.numpy as jnp
import numpy as np
from jax.experimental import pallas as pl
from jax.experimental.pallas import tpu as pltpu

# Explicit scoped-VMEM budget: above the 16/32 MiB defaults, with headroom
# under the 64 MiB physical per-TensorCore ceiling on v7x.
_VMEM_LIMIT_BYTES = 48 * 1024 * 1024


# --------------------------- offline weight / table prep ---------------------
def _reorder_cols_within_heads(w, num_heads, head_dim):
    """Permute projection-weight columns so that, within each head, features go
    from interleaved RoPE order (x0,y0,x1,y1,...) to half-split order
    (x0,x1,...,y0,y1,...).  Rotate-half then becomes a halves swap."""
    d_in = w.shape[0]
    return (w.reshape(d_in, num_heads, head_dim // 2, 2)
             .transpose(0, 1, 3, 2)
             .reshape(d_in, num_heads * head_dim))


def _make_halfsplit_rope_tables(seq_len, width, num_heads, head_dim, scale=1.0):
    """cos / signed-sin tables (numpy, (S, width)) matching the reordered
    columns.  Frequencies follow the full-projected-width interleaved
    convention of the reference: global pair index i, theta_i = 10000^(-2i/width)."""
    half_w = width // 2
    half_h = head_dim // 2
    inv_freq = 1.0 / (10000.0 ** (np.arange(half_w, dtype=np.float64) * 2.0 / width))
    ang = np.arange(seq_len, dtype=np.float64)[:, None] * inv_freq[None, :]
    cos = np.cos(ang).reshape(seq_len, num_heads, half_h)
    sin = np.sin(ang).reshape(seq_len, num_heads, half_h)
    cos_t = np.concatenate([cos, cos], axis=-1).reshape(seq_len, width) * scale
    sin_t = np.concatenate([-sin, sin], axis=-1).reshape(seq_len, width) * scale
    return cos_t, sin_t


def _group_major(table_np, seq_len, groups, cols_per_group):
    """(S, groups*cols) -> (groups, S, cols) so per-group blocks are full-width."""
    return np.ascontiguousarray(
        table_np.reshape(seq_len, groups, cols_per_group).transpose(1, 0, 2))


def _block_spec(block_shape, index_map, *, single_buffer=False):
    """BlockSpec helper; constant-index blocks request single buffering
    (halves their VMEM) when the pipeline_mode API is available."""
    if single_buffer and hasattr(pl, "Buffered"):
        try:
            return pl.BlockSpec(block_shape, index_map,
                                pipeline_mode=pl.Buffered(1))
        except TypeError:
            pass
    return pl.BlockSpec(block_shape, index_map)


# ------------------------------ in-kernel helpers -----------------------------
def _rotate_half(x, half):
    """Halves swap along the last axis (width == 2*half).  Uses the XLU roll
    when the axis is lane-aligned; slice+concat fallback for small toy dims."""
    if x.shape[-1] % 128 == 0:
        return pltpu.roll(x, shift=half, axis=-1)
    return jnp.concatenate([x[..., half:], x[..., :half]], axis=-1)


# --------------------------------- kernels ------------------------------------
def kv_proj_kernel(x_ref, wk_ref, wv_ref, ck_ref, sk_ref, k_out_ref, v_out_ref,
                   *, head_dim):
    """One kv group's K/V projection + RoPE(K) for one sequence tile."""
    half = head_dim // 2
    x = x_ref[...]                                                    # (Tp, D) bf16
    k = jnp.dot(x, wk_ref[...], preferred_element_type=jnp.float32)   # (Tp, HD) f32
    v = jnp.dot(x, wv_ref[...], preferred_element_type=jnp.float32)   # (Tp, HD) f32
    k = k * ck_ref[...] + _rotate_half(k, half) * sk_ref[...]
    k_out_ref[...] = k.astype(k_out_ref.dtype)
    v_out_ref[...] = v.astype(v_out_ref.dtype)


def flash_kernel(xq_ref, wq_ref, cq_ref, sq_ref, k_ref, v_ref, ctx_ref,
                 qh_ref, m_ref, l_ref, acc_ref, *, reps, head_dim):
    """Flash attention for one (batch, kv-group, q-tile); kv tiles = grid axis 3."""
    R, HD = reps, head_dim
    half = HD // 2
    kv = pl.program_id(3)

    # -- once per (b, g, q-tile): Q projection + RoPE, reset online softmax --
    @pl.when(kv == 0)
    def _():
        q = jnp.dot(xq_ref[...], wq_ref[...],
                    preferred_element_type=jnp.float32)               # (Tq, R*HD)
        for r in range(R):
            sl = slice(r * HD, (r + 1) * HD)
            q_r = q[:, sl]
            # 1/sqrt(HD) is folded into cq/sq.
            qh_ref[:, sl] = (q_r * cq_ref[:, sl]
                             + _rotate_half(q_r, half) * sq_ref[:, sl]
                             ).astype(qh_ref.dtype)
        m_ref[...] = jnp.full(m_ref.shape, -jnp.inf, m_ref.dtype)
        l_ref[...] = jnp.zeros(l_ref.shape, l_ref.dtype)
        acc_ref[...] = jnp.zeros(acc_ref.shape, acc_ref.dtype)

    # -- per KV tile: online-softmax update (K/V already projected + roped) --
    k = k_ref[...]                                                    # (Tk, HD) bf16
    v = v_ref[...]                                                    # (Tk, HD) bf16
    for r in range(R):
        sl = slice(r * HD, (r + 1) * HD)
        q_r = qh_ref[:, sl]                                           # (Tq, HD) bf16
        s = jax.lax.dot_general(q_r, k, (((1,), (1,)), ((), ())),
                                preferred_element_type=jnp.float32)   # (Tq, Tk)
        m_prev = m_ref[:, r:r + 1]
        m_new = jnp.maximum(m_prev, jnp.max(s, axis=-1, keepdims=True))
        alpha = jnp.exp(m_prev - m_new)
        p = jnp.exp(s - m_new)
        l_ref[:, r:r + 1] = alpha * l_ref[:, r:r + 1] + jnp.sum(p, axis=-1,
                                                                keepdims=True)
        acc_ref[:, sl] = alpha * acc_ref[:, sl] + jnp.dot(
            p.astype(jnp.bfloat16), v, preferred_element_type=jnp.float32)
        m_ref[:, r:r + 1] = m_new

    # -- last KV tile: normalize and emit per-group context -------------------
    @pl.when(kv == pl.num_programs(3) - 1)
    def _():
        for r in range(R):
            sl = slice(r * HD, (r + 1) * HD)
            inv_l = pl.reciprocal(l_ref[:, r:r + 1], approx=True)
            ctx_ref[:, sl] = (acc_ref[:, sl] * inv_l).astype(ctx_ref.dtype)


def out_proj_kernel(ctx_ref, wo_ref, o_ref, acc_ref):
    """Output projection: accumulate ctx_group @ Wo_group over the kv-group axis."""
    g = pl.program_id(2)

    @pl.when(g == 0)
    def _():
        acc_ref[...] = jnp.zeros(acc_ref.shape, acc_ref.dtype)

    acc_ref[...] += jnp.dot(ctx_ref[...], wo_ref[...],
                            preferred_element_type=jnp.float32)

    @pl.when(g == pl.num_programs(2) - 1)
    def _():
        o_ref[...] = acc_ref[...].astype(o_ref.dtype)


# ------------------------------ JAX wrapper ----------------------------------
def grouped_query_attention(x, wq, wk, wv, wo, *, query_heads, kv_heads,
                            q_tile=None, kv_tile=None, proj_tile=None):
    B, S, D = x.shape
    Dk = wk.shape[1]
    HD = D // query_heads
    G = kv_heads
    R = query_heads // kv_heads
    assert query_heads * HD == D and G * HD == Dk and R * G == query_heads

    # Tile defaults: 256 fills the 256-wide MXU on v6e/v7x; pass 128 on v5e.
    Tq = q_tile if q_tile is not None else min(S, 256)
    Tk = kv_tile if kv_tile is not None else min(S, 256)
    Tp = proj_tile if proj_tile is not None else min(S, 256)
    assert S % Tq == 0 and S % Tk == 0 and S % Tp == 0
    # NOTE: production shapes should use HD % 128 == 0 and row tiles that are
    # multiples of 16 (bf16 packing); the toy test relies on full-dim blocks.

    # ---- offline prep (once per weight set in a real model) -----------------
    wq_g = (_reorder_cols_within_heads(wq, query_heads, HD)
            .reshape(D, G, R * HD).transpose(1, 0, 2).astype(jnp.bfloat16))   # (G,D,R*HD)
    wk_g = (_reorder_cols_within_heads(wk, kv_heads, HD)
            .reshape(D, G, HD).transpose(1, 0, 2).astype(jnp.bfloat16))       # (G,D,HD)
    wv_g = wv.reshape(D, G, HD).transpose(1, 0, 2).astype(jnp.bfloat16)       # (G,D,HD)
    wo_g = wo.reshape(G, R * HD, D).astype(jnp.bfloat16)                      # (G,R*HD,D)
    x_b = x.astype(jnp.bfloat16)

    inv_sqrt_hd = 1.0 / math.sqrt(HD)
    cq, sq = _make_halfsplit_rope_tables(S, D, query_heads, HD, scale=inv_sqrt_hd)
    ck, sk = _make_halfsplit_rope_tables(S, Dk, kv_heads, HD)
    cq_g = jnp.asarray(_group_major(cq, S, G, R * HD), jnp.bfloat16)          # (G,S,R*HD)
    sq_g = jnp.asarray(_group_major(sq, S, G, R * HD), jnp.bfloat16)
    ck_g = jnp.asarray(_group_major(ck, S, G, HD), jnp.bfloat16)              # (G,S,HD)
    sk_g = jnp.asarray(_group_major(sk, S, G, HD), jnp.bfloat16)

    # ---- pass 1: K/V projection + RoPE(K), head-major bf16 output -----------
    k_rot, v_h = pl.pallas_call(
        functools.partial(kv_proj_kernel, head_dim=HD),
        out_shape=(jax.ShapeDtypeStruct((B, G, S, HD), jnp.bfloat16),
                   jax.ShapeDtypeStruct((B, G, S, HD), jnp.bfloat16)),
        grid=(B, G, S // Tp),
        in_specs=[
            pl.BlockSpec((None, Tp, D), lambda b, g, t: (b, t, 0)),
            _block_spec((None, D, HD), lambda b, g, t: (g, 0, 0),
                        single_buffer=True),                                  # Wk group
            _block_spec((None, D, HD), lambda b, g, t: (g, 0, 0),
                        single_buffer=True),                                  # Wv group
            pl.BlockSpec((None, Tp, HD), lambda b, g, t: (g, t, 0)),          # cos_k
            pl.BlockSpec((None, Tp, HD), lambda b, g, t: (g, t, 0)),          # sin_k
        ],
        out_specs=(
            pl.BlockSpec((None, None, Tp, HD), lambda b, g, t: (b, g, t, 0)),
            pl.BlockSpec((None, None, Tp, HD), lambda b, g, t: (b, g, t, 0)),
        ),
        compiler_params=pltpu.CompilerParams(
            dimension_semantics=("parallel", "parallel", "parallel"),
            vmem_limit_bytes=_VMEM_LIMIT_BYTES),
    )(x_b, wk_g, wv_g, ck_g, sk_g)

    # ---- pass 2: flash attention over precomputed K/V -----------------------
    ctx = pl.pallas_call(
        functools.partial(flash_kernel, reps=R, head_dim=HD),
        out_shape=jax.ShapeDtypeStruct((B, G, S, R * HD), jnp.bfloat16),
        grid=(B, G, S // Tq, S // Tk),
        in_specs=[
            _block_spec((None, Tq, D), lambda b, g, qt, kv: (b, qt, 0),
                        single_buffer=True),                                  # x (q rows)
            _block_spec((None, D, R * HD), lambda b, g, qt, kv: (g, 0, 0),
                        single_buffer=True),                                  # Wq group
            _block_spec((None, Tq, R * HD), lambda b, g, qt, kv: (g, qt, 0),
                        single_buffer=True),                                  # cos_q (scaled)
            _block_spec((None, Tq, R * HD), lambda b, g, qt, kv: (g, qt, 0),
                        single_buffer=True),                                  # sin_q (scaled)
            pl.BlockSpec((None, None, Tk, HD),
                         lambda b, g, qt, kv: (b, g, kv, 0)),                 # K (roped)
            pl.BlockSpec((None, None, Tk, HD),
                         lambda b, g, qt, kv: (b, g, kv, 0)),                 # V
        ],
        out_specs=pl.BlockSpec((None, None, Tq, R * HD),
                               lambda b, g, qt, kv: (b, g, qt, 0)),
        scratch_shapes=[
            pltpu.VMEM((Tq, R * HD), jnp.bfloat16),   # rotated Q (per group)
            pltpu.VMEM((Tq, R), jnp.float32),         # running max per head
            pltpu.VMEM((Tq, R), jnp.float32),         # running sum per head
            pltpu.VMEM((Tq, R * HD), jnp.float32),    # context accumulator
        ],
        compiler_params=pltpu.CompilerParams(
            dimension_semantics=("parallel", "parallel", "parallel", "arbitrary"),
            vmem_limit_bytes=_VMEM_LIMIT_BYTES),
    )(x_b, wq_g, cq_g, sq_g, k_rot, v_h)

    # ---- pass 3: output projection, contracting over kv groups --------------
    out = pl.pallas_call(
        out_proj_kernel,
        out_shape=jax.ShapeDtypeStruct((B, S, D), jnp.float32),
        grid=(B, S // Tq, G),
        in_specs=[
            pl.BlockSpec((None, None, Tq, R * HD), lambda b, t, g: (b, g, t, 0)),
            pl.BlockSpec((None, R * HD, D), lambda b, t, g: (g, 0, 0)),       # Wo group
        ],
        out_specs=pl.BlockSpec((None, Tq, D), lambda b, t, g: (b, t, 0)),
        scratch_shapes=[pltpu.VMEM((Tq, D), jnp.float32)],
        compiler_params=pltpu.CompilerParams(
            dimension_semantics=("parallel", "parallel", "arbitrary"),
            vmem_limit_bytes=_VMEM_LIMIT_BYTES),
    )(ctx, wo_g)

    return out


# ------------------------- pure-JAX reference (check) ------------------------
def _make_interleaved_rope_tables(seq_len, width):
    half = width // 2
    inv_freq = 1.0 / (10000.0 ** (np.arange(half, dtype=np.float64) * 2.0 / width))
    ang = np.arange(seq_len, dtype=np.float64)[:, None] * inv_freq[None, :]
    cos = np.cos(ang)
    sin = np.sin(ang)
    cos_full = np.repeat(cos, 2, axis=1)
    sin_signed = np.empty((seq_len, width), dtype=np.float64)
    sin_signed[:, 0::2] = -sin
    sin_signed[:, 1::2] = sin
    perm = np.zeros((width, width), dtype=np.float64)
    idx = np.arange(half)
    perm[2 * idx + 1, 2 * idx] = 1.0
    perm[2 * idx, 2 * idx + 1] = 1.0
    return (jnp.asarray(cos_full, jnp.float32),
            jnp.asarray(sin_signed, jnp.float32),
            jnp.asarray(perm, jnp.float32))


def reference_gqa(x, wq, wk, wv, wo, *, query_heads, kv_heads):
    B, S, D = x.shape
    Dk = wk.shape[1]
    HD = D // query_heads
    r = query_heads // kv_heads

    cq, sq, pq = _make_interleaved_rope_tables(S, D)
    ck, sk, pk = _make_interleaved_rope_tables(S, Dk)

    xb = x.astype(jnp.bfloat16)
    q = jnp.dot(xb, wq.astype(jnp.bfloat16), preferred_element_type=jnp.float32)
    k = jnp.dot(xb, wk.astype(jnp.bfloat16), preferred_element_type=jnp.float32)
    v = jnp.dot(xb, wv.astype(jnp.bfloat16), preferred_element_type=jnp.float32)
    q = q * cq + (q @ pq) * sq
    k = k * ck + (k @ pk) * sk

    q = q.reshape(B, S, query_heads, HD).transpose(0, 2, 1, 3)
    k = k.reshape(B, S, kv_heads, HD).transpose(0, 2, 1, 3)
    v = v.reshape(B, S, kv_heads, HD).transpose(0, 2, 1, 3)
    k = jnp.repeat(k, r, axis=1)
    v = jnp.repeat(v, r, axis=1)

    att = jnp.einsum('bhqd,bhkd->bhqk', q.astype(jnp.bfloat16), k.astype(jnp.bfloat16),
                     preferred_element_type=jnp.float32) / jnp.sqrt(jnp.float32(HD))
    att = jax.nn.softmax(att, axis=-1)
    out = jnp.einsum('bhqk,bhkd->bhqd', att.astype(jnp.bfloat16), v.astype(jnp.bfloat16),
                     preferred_element_type=jnp.float32)
    out = out.transpose(0, 2, 1, 3).reshape(B, S, D)
    return jnp.dot(out.astype(jnp.bfloat16), wo.astype(jnp.bfloat16),
                   preferred_element_type=jnp.float32)


# ---------------------------------- main -------------------------------------
if __name__ == "__main__":
    # Small shapes consistent with the module's constraints; kv_tile=8 with
    # S=16 exercises the multi-KV-tile online-softmax path, and the group
    # reduction in the output-projection pass runs over G=2 steps.
    B, S = 2, 16
    dimension, query_heads, kv_heads = 32, 4, 2
    head_dim = dimension // query_heads
    kv_dim = kv_heads * head_dim

    key = jax.random.PRNGKey(0)
    kx, k1, k2, k3, k4 = jax.random.split(key, 5)

    x = jax.random.normal(kx, (B, S, dimension), jnp.float32)
    w_scale = 1.0 / np.sqrt(dimension)
    wq = jax.random.uniform(k1, (dimension, dimension), jnp.float32, -w_scale, w_scale)
    wk = jax.random.uniform(k2, (dimension, kv_dim), jnp.float32, -w_scale, w_scale)
    wv = jax.random.uniform(k3, (dimension, kv_dim), jnp.float32, -w_scale, w_scale)
    wo = jax.random.uniform(k4, (dimension, dimension), jnp.float32, -w_scale, w_scale)

    out = grouped_query_attention(x, wq, wk, wv, wo,
                                  query_heads=query_heads, kv_heads=kv_heads,
                                  q_tile=16, kv_tile=8, proj_tile=16)
    out = jax.block_until_ready(out)

    ref = reference_gqa(x, wq, wk, wv, wo,
                        query_heads=query_heads, kv_heads=kv_heads)
    np.testing.assert_allclose(np.asarray(out), np.asarray(ref),
                               rtol=2e-2, atol=2e-2)

    print("KERNEL_OK")
</pallas_src>

<mosaic_0001>
module attributes {stable_mosaic.version = 11 : i64} {
  func.func @kv_proj_kernel(%arg0: i32, %arg1: i32, %arg2: i32, %arg3: memref<1x16x32xbf16, #tpu.memory_space<vmem>>, %arg4: memref<1x32x8xbf16, #tpu.memory_space<vmem>>, %arg5: memref<1x32x8xbf16, #tpu.memory_space<vmem>>, %arg6: memref<1x16x8xbf16, #tpu.memory_space<vmem>>, %arg7: memref<1x16x8xbf16, #tpu.memory_space<vmem>>, %arg8: memref<1x1x16x8xbf16, #tpu.memory_space<vmem>>, %arg9: memref<1x1x16x8xbf16, #tpu.memory_space<vmem>>) attributes {dimension_semantics = [#tpu.dimension_semantics<parallel>, #tpu.dimension_semantics<parallel>, #tpu.dimension_semantics<parallel>], iteration_bounds = array<i64: 2, 2, 1>, scalar_prefetch = 0 : i64, scratch_operands = 0 : i64, tpu.core_type = #tpu.core_type<tc>, window_params = [{transform_indices = @transform_0, window_bounds = array<i64: 1, 16, 32>}, {pipeline_mode = #tpu.pipeline_mode<synchronous>, transform_indices = @transform_1, window_bounds = array<i64: 1, 32, 8>}, {pipeline_mode = #tpu.pipeline_mode<synchronous>, transform_indices = @transform_2, window_bounds = array<i64: 1, 32, 8>}, {transform_indices = @transform_3, window_bounds = array<i64: 1, 16, 8>}, {transform_indices = @transform_4, window_bounds = array<i64: 1, 16, 8>}, {transform_indices = @transform_5, window_bounds = array<i64: 1, 1, 16, 8>}, {transform_indices = @transform_6, window_bounds = array<i64: 1, 1, 16, 8>}]} {
    %c0 = arith.constant 0 : index
    %c0_0 = arith.constant 0 : index
    %c0_1 = arith.constant 0 : index
    %0 = vector.load %arg3[%c0, %c0_0, %c0_1] : memref<1x16x32xbf16, #tpu.memory_space<vmem>>, vector<1x16x32xbf16>
    %1 = vector.shape_cast %0 : vector<1x16x32xbf16> to vector<16x32xbf16>
    %c0_2 = arith.constant 0 : index
    %c0_3 = arith.constant 0 : index
    %c0_4 = arith.constant 0 : index
    %2 = vector.load %arg4[%c0_2, %c0_3, %c0_4] : memref<1x32x8xbf16, #tpu.memory_space<vmem>>, vector<1x32x8xbf16>
    %3 = vector.shape_cast %2 : vector<1x32x8xbf16> to vector<32x8xbf16>
    %cst = arith.constant dense<0.000000e+00> : vector<16x8xf32>
    %4 = tpu.matmul %1, %3, %cst {dimension_numbers = #tpu.dot_dimension_numbers<[1], [0], [0], [1], [0, 0, 1, 1], [], []>} : vector<16x32xbf16>, vector<32x8xbf16>, vector<16x8xf32> -> vector<16x8xf32>
    %c0_5 = arith.constant 0 : index
    %c0_6 = arith.constant 0 : index
    %c0_7 = arith.constant 0 : index
    %5 = vector.load %arg5[%c0_5, %c0_6, %c0_7] : memref<1x32x8xbf16, #tpu.memory_space<vmem>>, vector<1x32x8xbf16>
    %6 = vector.shape_cast %5 : vector<1x32x8xbf16> to vector<32x8xbf16>
    %cst_8 = arith.constant dense<0.000000e+00> : vector<16x8xf32>
    %7 = tpu.matmul %1, %6, %cst_8 {dimension_numbers = #tpu.dot_dimension_numbers<[1], [0], [0], [1], [0, 0, 1, 1], [], []>} : vector<16x32xbf16>, vector<32x8xbf16>, vector<16x8xf32> -> vector<16x8xf32>
    %c0_9 = arith.constant 0 : index
    %c0_10 = arith.constant 0 : index
    %c0_11 = arith.constant 0 : index
    %8 = vector.load %arg6[%c0_9, %c0_10, %c0_11] : memref<1x16x8xbf16, #tpu.memory_space<vmem>>, vector<1x16x8xbf16>
    %9 = vector.shape_cast %8 : vector<1x16x8xbf16> to vector<16x8xbf16>
    %10 = arith.extf %9 : vector<16x8xbf16> to vector<16x8xf32>
    %11 = arith.mulf %4, %10 : vector<16x8xf32>
    %12 = vector.extract_strided_slice %4 {offsets = [0, 4], sizes = [16, 4], strides = [1, 1]} : vector<16x8xf32> to vector<16x4xf32>
    %13 = vector.extract_strided_slice %4 {offsets = [0, 0], sizes = [16, 4], strides = [1, 1]} : vector<16x8xf32> to vector<16x4xf32>
    %14 = tpu.concatenate %12, %13 in 1 : vector<16x4xf32>, vector<16x4xf32> -> vector<16x8xf32>
    %c0_12 = arith.constant 0 : index
    %c0_13 = arith.constant 0 : index
    %c0_14 = arith.constant 0 : index
    %15 = vector.load %arg7[%c0_12, %c0_13, %c0_14] : memref<1x16x8xbf16, #tpu.memory_space<vmem>>, vector<1x16x8xbf16>
    %16 = vector.shape_cast %15 : vector<1x16x8xbf16> to vector<16x8xbf16>
    %17 = arith.extf %16 : vector<16x8xbf16> to vector<16x8xf32>
    %18 = arith.mulf %14, %17 : vector<16x8xf32>
    %19 = arith.addf %11, %18 : vector<16x8xf32>
    %20 = arith.truncf %19 : vector<16x8xf32> to vector<16x8xbf16>
    %c0_15 = arith.constant 0 : index
    %c0_16 = arith.constant 0 : index
    %c0_17 = arith.constant 0 : index
    %c0_18 = arith.constant 0 : index
    %21 = vector.load %arg8[%c0_15, %c0_16, %c0_17, %c0_18] : memref<1x1x16x8xbf16, #tpu.memory_space<vmem>>, vector<1x1x16x8xbf16>
    %22 = vector.shape_cast %21 : vector<1x1x16x8xbf16> to vector<16x8xbf16>
    %23 = vector.shape_cast %20 : vector<16x8xbf16> to vector<1x1x16x8xbf16>
    tpu.vector_store %arg8[%c0_15, %c0_16, %c0_17, %c0_18], %23 {strides = array<i32>} : memref<1x1x16x8xbf16, #tpu.memory_space<vmem>>, vector<1x1x16x8xbf16>,
    %24 = arith.truncf %7 : vector<16x8xf32> to vector<16x8xbf16>
    %c0_19 = arith.constant 0 : index
    %c0_20 = arith.constant 0 : index
    %c0_21 = arith.constant 0 : index
    %c0_22 = arith.constant 0 : index
    %25 = vector.load %arg9[%c0_19, %c0_20, %c0_21, %c0_22] : memref<1x1x16x8xbf16, #tpu.memory_space<vmem>>, vector<1x1x16x8xbf16>
    %26 = vector.shape_cast %25 : vector<1x1x16x8xbf16> to vector<16x8xbf16>
    %27 = vector.shape_cast %24 : vector<16x8xbf16> to vector<1x1x16x8xbf16>
    tpu.vector_store %arg9[%c0_19, %c0_20, %c0_21, %c0_22], %27 {strides = array<i32>} : memref<1x1x16x8xbf16, #tpu.memory_space<vmem>>, vector<1x1x16x8xbf16>,
    return
  }
  func.func @transform_0(%arg0: i32, %arg1: i32, %arg2: i32) -> (i32, i32, i32) {
    %c0_i32 = arith.constant 0 : i32
    %c0_i32_0 = arith.constant 0 : i32
    return %arg0, %arg2, %c0_i32 : i32, i32, i32
  }
  func.func @transform_1(%arg0: i32, %arg1: i32, %arg2: i32) -> (i32, i32, i32) {
    %c0_i32 = arith.constant 0 : i32
    %c0_i32_0 = arith.constant 0 : i32
    %c0_i32_1 = arith.constant 0 : i32
    return %arg1, %c0_i32, %c0_i32_0 : i32, i32, i32
  }
  func.func @transform_2(%arg0: i32, %arg1: i32, %arg2: i32) -> (i32, i32, i32) {
    %c0_i32 = arith.constant 0 : i32
    %c0_i32_0 = arith.constant 0 : i32
    %c0_i32_1 = arith.constant 0 : i32
    return %arg1, %c0_i32, %c0_i32_0 : i32, i32, i32
  }
  func.func @transform_3(%arg0: i32, %arg1: i32, %arg2: i32) -> (i32, i32, i32) {
    %c0_i32 = arith.constant 0 : i32
    %c0_i32_0 = arith.constant 0 : i32
    return %arg1, %arg2, %c0_i32 : i32, i32, i32
  }
  func.func @transform_4(%arg0: i32, %arg1: i32, %arg2: i32) -> (i32, i32, i32) {
    %c0_i32 = arith.constant 0 : i32
    %c0_i32_0 = arith.constant 0 : i32
    return %arg1, %arg2, %c0_i32 : i32, i32, i32
  }
  func.func @transform_5(%arg0: i32, %arg1: i32, %arg2: i32) -> (i32, i32, i32, i32) {
    %c0_i32 = arith.constant 0 : i32
    %c0_i32_0 = arith.constant 0 : i32
    return %arg0, %arg1, %arg2, %c0_i32 : i32, i32, i32, i32
  }
  func.func @transform_6(%arg0: i32, %arg1: i32, %arg2: i32) -> (i32, i32, i32, i32) {
    %c0_i32 = arith.constant 0 : i32
    %c0_i32_0 = arith.constant 0 : i32
    return %arg0, %arg1, %arg2, %c0_i32 : i32, i32, i32, i32
  }
}

</mosaic_0001>

<llo_original>
// kernel: tpu_custom_call.1
$region0: #{tpu_custom_call.1}
  #allocation0 [shape = 'u32[]', space=smem, size = 0x4, offset = 0x4, fixed_abs, tag = 'smem constant byte address 0x4 - core index']
  #allocation1 [shape = 'u32[144,128]{1,0:T(1,128)}', space=vmem, size = 0x12000, scoped, tag = 'internal scratch']
  %s0 = inlined_call_operand.vmem [shape: bf16[2,16,32], index: 0, kind: input, shape index: {}]
  %s1 = inlined_call_operand.vmem [shape: bf16[2,32,8], index: 1, kind: input, shape index: {}]
  %s2 = inlined_call_operand.vmem [shape: bf16[2,32,8], index: 2, kind: input, shape index: {}]
  %s3 = inlined_call_operand.vmem [shape: bf16[2,16,8], index: 3, kind: input, shape index: {}]
  %s4 = inlined_call_operand.vmem [shape: bf16[2,16,8], index: 4, kind: input, shape index: {}]
  %s5 = inlined_call_operand.vmem [shape: bf16[2,2,16,8], index: 5, kind: output, shape index: {0}]
  %s6 = inlined_call_operand.vmem [shape: bf16[2,2,16,8], index: 6, kind: output, shape index: {1}]
  %7 = xla_tuple %s5, %s6
  %s8 = sld [smem:[#allocation0]]
  $region61: #{tpu_custom_call.1} parent=0
    _
  %s10 = ssub.s32 1, %s8
  %s11 = scalar_select 0, %s10, %s8
  loop: start=0, step=1, limit=6
  $region2: #{tpu_custom_call.1} parent=0 // loop_pre_header
    _
  $region3: #{tpu_custom_call.1} parent=0 // loop_header
    %s13 = sphi 0, %s17
    %p14 = scmp.ge.s32.totalorder %s13, 6
    %s20 = sphi 0, %s39
    %s21 = sphi 0, %s35
    %s22 = sphi 0, %s31
    %s23 = sphi 0, %s20
    %s24 = sphi 0, %s21
    %s25 = sphi 0, %s22
    %s26 = sphi 0, %s23
    %s27 = sphi 0, %s24
    %s28 = sphi 0, %s25
    %s44 = sphi 0, %s46
    %s47 = sphi 0, %s44
    %s48 = sphi 0, %s47
    %s64 = sphi 0, %s48
    %s70 = sphi 0, %s72
    %s73 = sphi 0, %s70
    %s74 = sphi 0, %s73
    %s90 = sphi 0, %s74
    %s96 = sphi 0, %s98
    %s99 = sphi 0, %s96
    %s100 = sphi 0, %s99
    %s116 = sphi 0, %s100
    %s124 = sphi 0, %s126
    %s127 = sphi 0, %s124
    %s128 = sphi 0, %s127
    %s144 = sphi 0, %s128
    %s152 = sphi 0, %s154
    %s155 = sphi 0, %s152
    %s156 = sphi 0, %s155
    %s172 = sphi 0, %s156
    %s182 = sphi 0, %s184
    %s185 = sphi 0, %s182
    %s186 = sphi 0, %s185
    %s202 = sphi 0, %s186
    %s212 = sphi 0, %s214
    %s215 = sphi 0, %s212
    %s216 = sphi 0, %s215
    %s232 = sphi 0, %s216
  $region4: #{tpu_custom_call.1} parent=0 // loop_header_branch
    %16 = sbr.rel (%p14) target = $region8
  $region5: #{tpu_custom_call.1} parent=0 // loop_body
    %s18 = ssub.s32 %s13, 1
    %s19 = ssub.s32 %s13, 2
    %s29 = sadd.s32 1, %s22
    %p30 = scmp.ge.s32.totalorder %s29, 1
    %s31 = scalar_select %p30, 0, %s29
    %s32 = sadd.s32 1, %s21
    %s33 = scalar_select %p30, %s32, %s21
    %p34 = scmp.ge.s32.totalorder %s33, 2
    %s35 = scalar_select %p34, 0, %s33
    %s36 = sadd.s32 1, %s20
    %s37 = scalar_select %p34, %s36, %s20
    %p38 = scmp.ge.s32.totalorder %s37, 2
    %s39 = scalar_select %p38, 0, %s37
    %s40 = ssub.s32 %s20, %s39
    %s41 = ssub.s32 %s22, %s31
    %s42 = sor.u32 %s40, %s41
    %p43 = scmp.eq.s32.totalorder %s42, 0
    %s45 = sadd.s32 %s44, 1
    %s46 = scalar_select %p43, %s44, %s45
    %p49 = pneg %p43
    %p50 = scmp.eq.s32.totalorder %s13, 3
    %p51 = por %p49, %p50
    %p52 = scmp.ne.s32.totalorder %s44, %s47
    %p53 = scmp.eq.s32.totalorder %s13, 0
    %p54 = por %p52, %p53
    %p55 = scmp.ne.s32.totalorder %s44, %s47
    %p56 = scmp.eq.s32.totalorder %s18, 3
    %p57 = por %p55, %p56
    %p58 = scmp.ne.s32.totalorder %s47, %s48
    %p59 = scmp.eq.s32.totalorder %s18, 0
    %p60 = por %p58, %p59
    %p61 = scmp.ne.s32.totalorder %s47, %s48
    %p62 = scmp.eq.s32.totalorder %s19, 3
    %p63 = por %p61, %p62
    %p65 = scmp.ne.s32.totalorder %s48, %s64
    %p66 = scmp.eq.s32.totalorder %s19, 0
    %p67 = por %p65, %p66
    %s68 = ssub.s32 %s21, %s35
    %p69 = scmp.eq.s32.totalorder %s68, 0
    %s71 = sadd.s32 %s70, 1
    %s72 = scalar_select %p69, %s70, %s71
    %p75 = pneg %p69
    %p76 = scmp.eq.s32.totalorder %s13, 3
    %p77 = por %p75, %p76
    %p78 = scmp.ne.s32.totalorder %s70, %s73
    %p79 = scmp.eq.s32.totalorder %s13, 0
    %p80 = por %p78, %p79
    %p81 = scmp.ne.s32.totalorder %s70, %s73
    %p82 = scmp.eq.s32.totalorder %s18, 3
    %p83 = por %p81, %p82
    %p84 = scmp.ne.s32.totalorder %s73, %s74
    %p85 = scmp.eq.s32.totalorder %s18, 0
    %p86 = por %p84, %p85
    %p87 = scmp.ne.s32.totalorder %s73, %s74
    %p88 = scmp.eq.s32.totalorder %s19, 3
    %p89 = por %p87, %p88
    %p91 = scmp.ne.s32.totalorder %s74, %s90
    %p92 = scmp.eq.s32.totalorder %s19, 0
    %p93 = por %p91, %p92
    %s94 = ssub.s32 %s21, %s35
    %p95 = scmp.eq.s32.totalorder %s94, 0
    %s97 = sadd.s32 %s96, 1
    %s98 = scalar_select %p95, %s96, %s97
    %p101 = pneg %p95
    %p102 = scmp.eq.s32.totalorder %s13, 3
    %p103 = por %p101, %p102
    %p104 = scmp.ne.s32.totalorder %s96, %s99
    %p105 = scmp.eq.s32.totalorder %s13, 0
    %p106 = por %p104, %p105
    %p107 = scmp.ne.s32.totalorder %s96, %s99
    %p108 = scmp.eq.s32.totalorder %s18, 3
    %p109 = por %p107, %p108
    %p110 = scmp.ne.s32.totalorder %s99, %s100
    %p111 = scmp.eq.s32.totalorder %s18, 0
    %p112 = por %p110, %p111
    %p113 = scmp.ne.s32.totalorder %s99, %s100
    %p114 = scmp.eq.s32.totalorder %s19, 3
    %p115 = por %p113, %p114
    %p117 = scmp.ne.s32.totalorder %s100, %s116
    %p118 = scmp.eq.s32.totalorder %s19, 0
    %p119 = por %p117, %p118
    %s120 = ssub.s32 %s21, %s35
    %s121 = ssub.s32 %s22, %s31
    %s122 = sor.u32 %s120, %s121
    %p123 = scmp.eq.s32.totalorder %s122, 0
    %s125 = sadd.s32 %s124, 1
    %s126 = scalar_select %p123, %s124, %s125
    %p129 = pneg %p123
    %p130 = scmp.eq.s32.totalorder %s13, 3
    %p131 = por %p129, %p130
    %p132 = scmp.ne.s32.totalorder %s124, %s127
    %p133 = scmp.eq.s32.totalorder %s13, 0
    %p134 = por %p132, %p133
    %p135 = scmp.ne.s32.totalorder %s124, %s127
    %p136 = scmp.eq.s32.totalorder %s18, 3
    %p137 = por %p135, %p136
    %p138 = scmp.ne.s32.totalorder %s127, %s128
    %p139 = scmp.eq.s32.totalorder %s18, 0
    %p140 = por %p138, %p139
    %p141 = scmp.ne.s32.totalorder %s127, %s128
    %p142 = scmp.eq.s32.totalorder %s19, 3
    %p143 = por %p141, %p142
    %p145 = scmp.ne.s32.totalorder %s128, %s144
    %p146 = scmp.eq.s32.totalorder %s19, 0
    %p147 = por %p145, %p146
    %s148 = ssub.s32 %s21, %s35
    %s149 = ssub.s32 %s22, %s31
    %s150 = sor.u32 %s148, %s149
    %p151 = scmp.eq.s32.totalorder %s150, 0
    %s153 = sadd.s32 %s152, 1
    %s154 = scalar_select %p151, %s152, %s153
    %p157 = pneg %p151
    %p158 = scmp.eq.s32.totalorder %s13, 3
    %p159 = por %p157, %p158
    %p160 = scmp.ne.s32.totalorder %s152, %s155
    %p161 = scmp.eq.s32.totalorder %s13, 0
    %p162 = por %p160, %p161
    %p163 = scmp.ne.s32.totalorder %s152, %s155
    %p164 = scmp.eq.s32.totalorder %s18, 3
    %p165 = por %p163, %p164
    %p166 = scmp.ne.s32.totalorder %s155, %s156
    %p167 = scmp.eq.s32.totalorder %s18, 0
    %p168 = por %p166, %p167
    %p169 = scmp.ne.s32.totalorder %s155, %s156
    %p170 = scmp.eq.s32.totalorder %s19, 3
    %p171 = por %p169, %p170
    %p173 = scmp.ne.s32.totalorder %s156, %s172
    %p174 = scmp.eq.s32.totalorder %s19, 0
    %p175 = por %p173, %p174
    %s176 = ssub.s32 %s20, %s39
    %s177 = ssub.s32 %s21, %s35
    %s178 = sor.u32 %s176, %s177
    %s179 = ssub.s32 %s22, %s31
    %s180 = sor.u32 %s178, %s179
    %p181 = scmp.eq.s32.totalorder %s180, 0
    %s183 = sadd.s32 %s182, 1
    %s184 = scalar_select %p181, %s182, %s183
    %p187 = pneg %p181
    %p188 = scmp.eq.s32.totalorder %s13, 3
    %p189 = por %p187, %p188
    %p190 = scmp.ne.s32.totalorder %s182, %s185
    %p191 = scmp.eq.s32.totalorder %s13, 0
    %p192 = por %p190, %p191
    %p193 = scmp.ne.s32.totalorder %s182, %s185
    %p194 = scmp.eq.s32.totalorder %s18, 3
    %p195 = por %p193, %p194
    %p196 = scmp.ne.s32.totalorder %s185, %s186
    %p197 = scmp.eq.s32.totalorder %s18, 0
    %p198 = por %p196, %p197
    %p199 = scmp.ne.s32.totalorder %s185, %s186
    %p200 = scmp.eq.s32.totalorder %s19, 3
    %p201 = por %p199, %p200
    %p203 = scmp.ne.s32.totalorder %s186, %s202
    %p204 = scmp.eq.s32.totalorder %s19, 0
    %p205 = por %p203, %p204
    %s206 = ssub.s32 %s20, %s39
    %s207 = ssub.s32 %s21, %s35
    %s208 = sor.u32 %s206, %s207
    %s209 = ssub.s32 %s22, %s31
    %s210 = sor.u32 %s208, %s209
    %p211 = scmp.eq.s32.totalorder %s210, 0
    %s213 = sadd.s32 %s212, 1
    %s214 = scalar_select %p211, %s212, %s213
    %p217 = pneg %p211
    %p218 = scmp.eq.s32.totalorder %s13, 3
    %p219 = por %p217, %p218
    %p220 = scmp.ne.s32.totalorder %s212, %s215
    %p221 = scmp.eq.s32.totalorder %s13, 0
    %p222 = por %p220, %p221
    %p223 = scmp.ne.s32.totalorder %s212, %s215
    %p224 = scmp.eq.s32.totalorder %s18, 3
    %p225 = por %p223, %p224
    %p226 = scmp.ne.s32.totalorder %s215, %s216
    %p227 = scmp.eq.s32.totalorder %s18, 0
    %p228 = por %p226, %p227
    %p229 = scmp.ne.s32.totalorder %s215, %s216
    %p230 = scmp.eq.s32.totalorder %s19, 3
    %p231 = por %p229, %p230
    %p233 = scmp.ne.s32.totalorder %s216, %s232
    %p234 = scmp.eq.s32.totalorder %s19, 0
    %p235 = por %p233, %p234
    %p236 = scmp.le.s32.totalorder 1, %s13
    %p237 = scmp.lt.s32.totalorder %s13, 5
    %p238 = pnand %p236, %p237
    %p239 = pneg %p238
    // Predicated region
    $region9: #{tpu_custom_call.1} parent=5 // pred_check
      _
    $region10: #{tpu_custom_call.1} parent=5 // pred_check_branch
      %241 = sbr.rel (%p238) target = $region12
    $region11: #{tpu_custom_call.1} parent=5 // pred_region
      %s242 = ssub.s32 %s13, 1
      // Predicated region
      $region13: #{tpu_custom_call.1} parent=11 // pred_check
        %p243 = pneg %p86
      $region14: #{tpu_custom_call.1} parent=11 // pred_check_branch
        %245 = sbr.rel (%p243) target = $region16
      $region15: #{tpu_custom_call.1} parent=11 // pred_region
        %p246 = scmp.lt.s32.totalorder %s24, 1
        %s247 = scalar_select %p246, %s24, 1
        %s248 = smul.addr %s247, 4
        %s249 = smul.addr %s248, 4
        %s250 = scalar_lea.vmem %s1, %s249
      $region16: #{tpu_custom_call.1} parent=11 // pred_fallthru
        _
      // Predicated region
      $region17: #{tpu_custom_call.1} parent=11 // pred_check
        %p251 = pneg %p112
      $region18: #{tpu_custom_call.1} parent=11 // pred_check_branch
        %253 = sbr.rel (%p251) target = $region20
      $region19: #{tpu_custom_call.1} parent=11 // pred_region
        %p254 = scmp.lt.s32.totalorder %s24, 1
        %s255 = scalar_select %p254, %s24, 1
        %s256 = smul.addr %s255, 4
        %s257 = smul.addr %s256, 4
        %s258 = scalar_lea.vmem %s2, %s257
      $region20: #{tpu_custom_call.1} parent=11 // pred_fallthru
        _
    $region12: #{tpu_custom_call.1} parent=5 // pred_fallthru
      _
    %p259 = scmp.lt.s32.totalorder %s13, 4
    // Predicated region
    $region21: #{tpu_custom_call.1} parent=5 // pred_check
      %p260 = pneg %p259
    $region22: #{tpu_custom_call.1} parent=5 // pred_check_branch
      %262 = sbr.rel (%p260) target = $region24
    $region23: #{tpu_custom_call.1} parent=5 // pred_region
      // Predicated region
      $region25: #{tpu_custom_call.1} parent=23 // pred_check
        %p263 = pneg %p54
      $region26: #{tpu_custom_call.1} parent=23 // pred_check_branch
        %265 = sbr.rel (%p263) target = $region28
      $region27: #{tpu_custom_call.1} parent=23 // pred_region
        %s266 = smul.u32 2, %s22
        %p267 = scmp.lt.s32.totalorder %s20, 1
        %s268 = scalar_select %p267, %s20, 1
        %p269 = scmp.lt.s32.totalorder %s266, 1
        %s270 = scalar_select %p269, %s266, 1
        %s271 = smul.addr %s268, 2
        %s272 = sadd.s32 %s270, %s271
        %s273 = smul.addr %s272, 4
        %s274 = scalar_lea.vmem %s0, %s273
        %s275 = smul.u32 2, %s22
      $region28: #{tpu_custom_call.1} parent=23 // pred_fallthru
        _
      // Predicated region
      $region29: #{tpu_custom_call.1} parent=23 // pred_check
        %p276 = pneg %p134
      $region30: #{tpu_custom_call.1} parent=23 // pred_check_branch
        %278 = sbr.rel (%p276) target = $region32
      $region31: #{tpu_custom_call.1} parent=23 // pred_region
        %s279 = smul.u32 2, %s22
        %p280 = scmp.lt.s32.totalorder %s21, 1
        %s281 = scalar_select %p280, %s21, 1
        %p282 = scmp.lt.s32.totalorder %s279, 1
        %s283 = scalar_select %p282, %s279, 1
        %s284 = smul.addr %s281, 2
        %s285 = sadd.s32 %s283, %s284
        %s286 = smul.addr %s285, 4
        %s287 = scalar_lea.vmem %s3, %s286
        %s288 = smul.u32 2, %s22
      $region32: #{tpu_custom_call.1} parent=23 // pred_fallthru
        _
      // Predicated region
      $region33: #{tpu_custom_call.1} parent=23 // pred_check
        %p289 = pneg %p162
      $region34: #{tpu_custom_call.1} parent=23 // pred_check_branch
        %291 = sbr.rel (%p289) target = $region36
      $region35: #{tpu_custom_call.1} parent=23 // pred_region
        %s292 = smul.u32 2, %s22
        %p293 = scmp.lt.s32.totalorder %s21, 1
        %s294 = scalar_select %p293, %s21, 1
        %p295 = scmp.lt.s32.totalorder %s292, 1
        %s296 = scalar_select %p295, %s292, 1
        %s297 = smul.addr %s294, 2
        %s298 = sadd.s32 %s296, %s297
        %s299 = smul.addr %s298, 4
        %s300 = scalar_lea.vmem %s4, %s299
        %s301 = smul.u32 2, %s22
      $region36: #{tpu_custom_call.1} parent=23 // pred_fallthru
        _
    $region24: #{tpu_custom_call.1} parent=5 // pred_fallthru
      _
    %p302 = scmp.le.s32.totalorder 1, %s13
    %p303 = scmp.lt.s32.totalorder %s13, 5
    %p304 = pnand %p302, %p303
    %p305 = pneg %p304
    // Predicated region
    $region37: #{tpu_custom_call.1} parent=5 // pred_check
      _
    $region38: #{tpu_custom_call.1} parent=5 // pred_check_branch
      %307 = sbr.rel (%p304) target = $region40
    $region39: #{tpu_custom_call.1} parent=5 // pred_region
      %s308 = ssub.s32 %s13, 1
      %s309 = smul.u32 2, %s25
      %p310 = scmp.lt.s32.totalorder %s23, 1
      %s311 = scalar_select %p310, %s23, 1
      %p312 = scmp.lt.s32.totalorder %s309, 1
      %s313 = scalar_select %p312, %s309, 1
      %s314 = smul.addr %s311, 2
      %s315 = sadd.s32 %s313, %s314
      %s316 = smul.addr %s315, 4
      %s317 = scalar_lea.vmem %s0, %s316
      %p318 = pneg %p60
      %p319 = pneg %p57
      %p320 = scmp.lt.s32.totalorder %s24, 1
      %s321 = scalar_select %p320, %s24, 1
      %s322 = smul.addr %s321, 4
      %s323 = smul.addr %s322, 4
      %s324 = scalar_lea.vmem %s1, %s323
      %p325 = pneg %p86
      %p326 = pneg %p83
      %p327 = scmp.lt.s32.totalorder %s24, 1
      %s328 = scalar_select %p327, %s24, 1
      %s329 = smul.addr %s328, 4
      %s330 = smul.addr %s329, 4
      %s331 = scalar_lea.vmem %s2, %s330
      %p332 = pneg %p112
      %p333 = pneg %p109
      %s334 = smul.u32 2, %s25
      %p335 = scmp.lt.s32.totalorder %s24, 1
      %s336 = scalar_select %p335, %s24, 1
      %p337 = scmp.lt.s32.totalorder %s334, 1
      %s338 = scalar_select %p337, %s334, 1
      %s339 = smul.addr %s336, 2
      %s340 = sadd.s32 %s338, %s339
      %s341 = smul.addr %s340, 4
      %s342 = scalar_lea.vmem %s3, %s341
      %p343 = pneg %p140
      %p344 = pneg %p137
      %s345 = smul.u32 2, %s25
      %p346 = scmp.lt.s32.totalorder %s24, 1
      %s347 = scalar_select %p346, %s24, 1
      %p348 = scmp.lt.s32.totalorder %s345, 1
      %s349 = scalar_select %p348, %s345, 1
      %s350 = smul.addr %s347, 2
      %s351 = sadd.s32 %s349, %s350
      %s352 = smul.addr %s351, 4
      %s353 = scalar_lea.vmem %s4, %s352
      %p354 = pneg %p168
      %p355 = pneg %p165
      %p356 = pneg %p198
      %p357 = pneg %p195
      %s358 = smul.u32 2, %s25
      %p359 = scmp.lt.s32.totalorder %s23, 1
      %s360 = scalar_select %p359, %s23, 1
      %p361 = scmp.lt.s32.totalorder %s24, 1
      %s362 = scalar_select %p361, %s24, 1
      %p363 = scmp.lt.s32.totalorder %s358, 1
      %s364 = scalar_select %p363, %s358, 1
      %s365 = smul.addr %s362, 2
      %s366 = sadd.s32 %s364, %s365
      %s367 = smul.addr %s360, 4
      %s368 = sadd.s32 %s366, %s367
      %s369 = smul.addr %s368, 4
      %s370 = scalar_lea.vmem %s5, %s369
      %p371 = pneg %p228
      %p372 = pneg %p225
      %s373 = smul.u32 2, %s25
      %p374 = scmp.lt.s32.totalorder %s23, 1
      %s375 = scalar_select %p374, %s23, 1
      %p376 = scmp.lt.s32.totalorder %s24, 1
      %s377 = scalar_select %p376, %s24, 1
      %p378 = scmp.lt.s32.totalorder %s373, 1
      %s379 = scalar_select %p378, %s373, 1
      %s380 = smul.addr %s377, 2
      %s381 = sadd.s32 %s379, %s380
      %s382 = smul.addr %s375, 4
      %s383 = sadd.s32 %s381, %s382
      %s384 = smul.addr %s383, 4
      %s385 = scalar_lea.vmem %s6, %s384
      %s386 = smul.u32 2, %s25
      %p387 = scmp.lt.s32.totalorder %s23, 1
      %s388 = scalar_select %p387, %s23, 1
      %p389 = scmp.lt.s32.totalorder %s386, 1
      %s390 = scalar_select %p389, %s386, 1
      %s391 = smul.addr %s388, 2
      %s392 = sadd.s32 %s390, %s391
      %s393 = smul.addr %s392, 4
      %s394 = scalar_lea.vmem %s0, %s393
      %s395 = smul.u32 2, %s25
      %p396 = scmp.lt.s32.totalorder %s24, 1
      %s397 = scalar_select %p396, %s24, 1
      %s398 = smul.addr %s397, 4
      %s399 = smul.addr %s398, 4
      %s400 = scalar_lea.vmem %s1, %s399
      %p401 = scmp.lt.s32.totalorder %s24, 1
      %s402 = scalar_select %p401, %s24, 1
      %s403 = smul.addr %s402, 4
      %s404 = smul.addr %s403, 4
      %s405 = scalar_lea.vmem %s2, %s404
      %s406 = smul.u32 2, %s25
      %p407 = scmp.lt.s32.totalorder %s24, 1
      %s408 = scalar_select %p407, %s24, 1
      %p409 = scmp.lt.s32.totalorder %s406, 1
      %s410 = scalar_select %p409, %s406, 1
      %s411 = smul.addr %s408, 2
      %s412 = sadd.s32 %s410, %s411
      %s413 = smul.addr %s412, 4
      %s414 = scalar_lea.vmem %s3, %s413
      %s415 = smul.u32 2, %s25
      %s416 = smul.u32 2, %s25
      %p417 = scmp.lt.s32.totalorder %s24, 1
      %s418 = scalar_select %p417, %s24, 1
      %p419 = scmp.lt.s32.totalorder %s416, 1
      %s420 = scalar_select %p419, %s416, 1
      %s421 = smul.addr %s418, 2
      %s422 = sadd.s32 %s420, %s421
      %s423 = smul.addr %s422, 4
      %s424 = scalar_lea.vmem %s4, %s423
      %s425 = smul.u32 2, %s25
      %s426 = smul.u32 2, %s25
      %p427 = scmp.lt.s32.totalorder %s23, 1
      %s428 = scalar_select %p427, %s23, 1
      %p429 = scmp.lt.s32.totalorder %s24, 1
      %s430 = scalar_select %p429, %s24, 1
      %p431 = scmp.lt.s32.totalorder %s426, 1
      %s432 = scalar_select %p431, %s426, 1
      %s433 = smul.addr %s430, 2
      %s434 = sadd.s32 %s432, %s433
      %s435 = smul.addr %s428, 4
      %s436 = sadd.s32 %s434, %s435
      %s437 = smul.addr %s436, 4
      %s438 = scalar_lea.vmem %s5, %s437
      %s439 = smul.u32 2, %s25
      %s440 = smul.u32 2, %s25
      %p441 = scmp.lt.s32.totalorder %s23, 1
      %s442 = scalar_select %p441, %s23, 1
      %p443 = scmp.lt.s32.totalorder %s24, 1
      %s444 = scalar_select %p443, %s24, 1
      %p445 = scmp.lt.s32.totalorder %s440, 1
      %s446 = scalar_select %p445, %s440, 1
      %s447 = smul.addr %s444, 2
      %s448 = sadd.s32 %s446, %s447
      %s449 = smul.addr %s442, 4
      %s450 = sadd.s32 %s448, %s449
      %s451 = smul.addr %s450, 4
      %s452 = scalar_lea.vmem %s6, %s451
      %s453 = smul.u32 2, %s25
      %v455 = vld [vmem:[%s394] sm:$0xf]
      %v456 = vld [vmem:[%s394 + $0x4] sm:$0xf]
      %v457 = vld [vmem:[%s400] sm:$0xf]
      %v458 = vld [vmem:[%s400 + $0x4] sm:$0xf]
      %v459 = vld [vmem:[%s400 + $0x8] sm:$0xf]
      %v460 = vld [vmem:[%s400 + $0xc] sm:$0xf]
      %v463 = vunpack.c.l.b16 %v455
      %v464 = vunpack.c.l.b16 %v456
      %v465 = vpack.c.b16 %v464, %v463
      %v470 = vunpack.c.l.b16 %v457
      %v471 = vunpack.c.l.b16 %v458
      %v472 = vunpack.c.l.b16 %v459
      %v473 = vunpack.c.l.b16 %v460
      %v474 = vpack.c.b16 %v471, %v470
      %v475 = vpack.c.b16 %v473, %v472
      %vm478 = vcmask 261120
      %v480 = vsel %vm478, %v465, 0
      %482 = vmatprep.subr.bf16.mxu0 0
      %483 = vmatpush1.bf16.msra.mxu0 %v474
      %484 = vmatprep.subr.bf16.mxu0 0
      %485 = vmatpush1.bf16.msra.mxu0 %v475
      %486 = vmatprep.subr.bf16.mxu0 0
      %487 = vmatpush1.bf16.msra.mxu0 0
      %488 = vmatprep.subr.bf16.mxu0 0
      %489 = vmatpush1.bf16.msra.mxu0 0
      %490 = vmatprep.subr.bf16.mxu0 0
      %491 = vmatpush1.bf16.msra.mxu0 0
      %492 = vmatprep.subr.bf16.mxu0 0
      %493 = vmatpush1.bf16.msra.mxu0 0
      %494 = vmatprep.subr.bf16.mxu0 0
      %495 = vmatpush1.bf16.msra.mxu0 0
      %496 = vmatprep.subr.bf16.mxu0 0
      %497 = vmatpush1.bf16.msra.mxu0 0
      %498 = vmatprep.subr.bf16.mxu0 0
      %499 = vmatpush1.bf16.msra.mxu0 0
      %500 = vmatprep.subr.bf16.mxu0 0
      %501 = vmatpush1.bf16.msra.mxu0 0
      %502 = vmatprep.subr.bf16.mxu0 0
      %503 = vmatpush1.bf16.msra.mxu0 0
      %504 = vmatprep.subr.bf16.mxu0 0
      %505 = vmatpush1.bf16.msra.mxu0 0
      %506 = vmatprep.subr.bf16.mxu0 0
      %507 = vmatpush1.bf16.msra.mxu0 0
      %508 = vmatprep.subr.bf16.mxu0 0
      %509 = vmatpush1.bf16.msra.mxu0 0
      %510 = vmatprep.subr.bf16.mxu0 0
      %511 = vmatpush1.bf16.msra.mxu0 0
      %512 = vmatprep.subr.bf16.mxu0 0
      %513 = vmatpush1.bf16.msra.mxu0 0
      %514 = vmatprep.mubr.bf16.mxu0 0
      %515 = vmatmul.mubr.bf16.gmra.mrb[0].mxu0 %v480
      %v516 = vpop.f32.mrb[0].mxu0
      %v517 = vadd.f32 0.0, %v516
      %v518 = vpop.f32.mrb[0].mxu0
      %v519 = vpop.f32.mrb[0].mxu0
      %v520 = vadd.f32 0.0, %v519
      %v521 = vpop.f32.mrb[0].mxu0
      %522 = vdwg.mxu0
      %v523 = vld [vmem:[%s405] sm:$0xf]
      %v524 = vld [vmem:[%s405 + $0x4] sm:$0xf]
      %v525 = vld [vmem:[%s405 + $0x8] sm:$0xf]
      %v526 = vld [vmem:[%s405 + $0xc] sm:$0xf]
      %v531 = vunpack.c.l.b16 %v523
      %v532 = vunpack.c.l.b16 %v524
      %v533 = vunpack.c.l.b16 %v525
      %v534 = vunpack.c.l.b16 %v526
      %v535 = vpack.c.b16 %v532, %v531
      %v536 = vpack.c.b16 %v534, %v533
      %539 = vmatprep.subr.bf16.mxu0 0
      %540 = vmatpush1.bf16.msra.mxu0 %v535
      %541 = vmatprep.subr.bf16.mxu0 0
      %542 = vmatpush1.bf16.msra.mxu0 %v536
      %543 = vmatprep.subr.bf16.mxu0 0
      %544 = vmatpush1.bf16.msra.mxu0 0
      %545 = vmatprep.subr.bf16.mxu0 0
      %546 = vmatpush1.bf16.msra.mxu0 0
      %547 = vmatprep.subr.bf16.mxu0 0
      %548 = vmatpush1.bf16.msra.mxu0 0
      %549 = vmatprep.subr.bf16.mxu0 0
      %550 = vmatpush1.bf16.msra.mxu0 0
      %551 = vmatprep.subr.bf16.mxu0 0
      %552 = vmatpush1.bf16.msra.mxu0 0
      %553 = vmatprep.subr.bf16.mxu0 0
      %554 = vmatpush1.bf16.msra.mxu0 0
      %555 = vmatprep.subr.bf16.mxu0 0
      %556 = vmatpush1.bf16.msra.mxu0 0
      %557 = vmatprep.subr.bf16.mxu0 0
      %558 = vmatpush1.bf16.msra.mxu0 0
      %559 = vmatprep.subr.bf16.mxu0 0
      %560 = vmatpush1.bf16.msra.mxu0 0
      %561 = vmatprep.subr.bf16.mxu0 0
      %562 = vmatpush1.bf16.msra.mxu0 0
      %563 = vmatprep.subr.bf16.mxu0 0
      %564 = vmatpush1.bf16.msra.mxu0 0
      %565 = vmatprep.subr.bf16.mxu0 0
      %566 = vmatpush1.bf16.msra.mxu0 0
      %567 = vmatprep.subr.bf16.mxu0 0
      %568 = vmatpush1.bf16.msra.mxu0 0
      %569 = vmatprep.subr.bf16.mxu0 0
      %570 = vmatpush1.bf16.msra.mxu0 0
      %571 = vmatprep.mubr.bf16.mxu0 0
      %572 = vmatmul.mubr.bf16.gmra.mrb[0].mxu0 %v480
      %v573 = vpop.f32.mrb[0].mxu0
      %v574 = vadd.f32 0.0, %v573
      %v575 = vpop.f32.mrb[0].mxu0
      %v576 = vpop.f32.mrb[0].mxu0
      %v577 = vadd.f32 0.0, %v576
      %v578 = vpop.f32.mrb[0].mxu0
      %579 = vdwg.mxu0
      %v580 = vld [vmem:[%s414] sm:$0xf]
      %v581 = vld [vmem:[%s414 + $0x4] sm:$0xf]
      %v582 = vunpack.c.l.bf16 %v580
      %v583 = vunpack.c.l.bf16 %v581
      %v584 = vmul.f32 %v517, %v582
      %v585 = vmul.f32 %v520, %v583
      %588 = vrot.lane.b32.xlu0 %v517, 124
      %v589 = vpop.permute.xlu0 %588
      %590 = vrot.lane.b32.xlu0 %v520, 124
      %v591 = vpop.permute.xlu0 %590
      %594 = vrot.lane.b32.xlu0 %v517, 4
      %v595 = vpop.permute.xlu0 %594
      %596 = vrot.lane.b32.xlu0 %v520, 4
      %v597 = vpop.permute.xlu0 %596
      %vm600 = vcmask 31744
      %v601 = vsel %vm600, %v589, %v595
      %v602 = vsel %vm600, %v591, %v597
      %v603 = vld [vmem:[%s424] sm:$0xf]
      %v604 = vld [vmem:[%s424 + $0x4] sm:$0xf]
      %v605 = vunpack.c.l.bf16 %v603
      %v606 = vunpack.c.l.bf16 %v604
      %v607 = vmul.f32 %v601, %v605
      %v608 = vmul.f32 %v602, %v606
      %v609 = vadd.f32 %v584, %v607
      %v610 = vadd.f32 %v585, %v608
      %v611 = vpack.c.bf16 %v610, %v609
      %v613 = vunpack.c.l.b16 %v611
      %v614 = vunpack.c.h.b16 %v611
      %v615 = vpack.c.b16 %v613, %v613
      %v616 = vpack.c.b16 %v614, %v614
      %vm619 = vcmask 60416
      %620 = vst.msk [vmem:[%s438] sm:$0xf] %vm619, %v615
      %621 = vst.msk [vmem:[%s438 + $0x4] sm:$0xf] %vm619, %v616
      %v622 = vpack.c.bf16 %v577, %v574
      %v624 = vunpack.c.l.b16 %v622
      %v625 = vunpack.c.h.b16 %v622
      %v626 = vpack.c.b16 %v624, %v624
      %v627 = vpack.c.b16 %v625, %v625
      %630 = vst.msk [vmem:[%s452] sm:$0xf] %vm619, %v626
      %631 = vst.msk [vmem:[%s452 + $0x4] sm:$0xf] %vm619, %v627
      %s632 = smul.u32 2, %s25
      %p633 = scmp.lt.s32.totalorder %s23, 1
      %s634 = scalar_select %p633, %s23, 1
      %p635 = scmp.lt.s32.totalorder %s24, 1
      %s636 = scalar_select %p635, %s24, 1
      %p637 = scmp.lt.s32.totalorder %s632, 1
      %s638 = scalar_select %p637, %s632, 1
      %s639 = smul.addr %s636, 2
      %s640 = sadd.s32 %s638, %s639
      %s641 = smul.addr %s634, 4
      %s642 = sadd.s32 %s640, %s641
      %s643 = smul.addr %s642, 4
      %s644 = scalar_lea.vmem %s5, %s643
      %s645 = smul.u32 2, %s25
      %p646 = scmp.lt.s32.totalorder %s23, 1
      %s647 = scalar_select %p646, %s23, 1
      %p648 = scmp.lt.s32.totalorder %s24, 1
      %s649 = scalar_select %p648, %s24, 1
      %p650 = scmp.lt.s32.totalorder %s645, 1
      %s651 = scalar_select %p650, %s645, 1
      %s652 = smul.addr %s649, 2
      %s653 = sadd.s32 %s651, %s652
      %s654 = smul.addr %s647, 4
      %s655 = sadd.s32 %s653, %s654
      %s656 = smul.addr %s655, 4
      %s657 = scalar_lea.vmem %s6, %s656
      // Predicated region
      $region41: #{tpu_custom_call.1} parent=39 // pred_check
        %p658 = pneg %p195
      $region42: #{tpu_custom_call.1} parent=39 // pred_check_branch
        %660 = sbr.rel (%p658) target = $region44
      $region43: #{tpu_custom_call.1} parent=39 // pred_region
        %s661 = smul.u32 2, %s25
      $region44: #{tpu_custom_call.1} parent=39 // pred_fallthru
        _
      // Predicated region
      $region45: #{tpu_custom_call.1} parent=39 // pred_check
        %p662 = pneg %p225
      $region46: #{tpu_custom_call.1} parent=39 // pred_check_branch
        %664 = sbr.rel (%p662) target = $region48
      $region47: #{tpu_custom_call.1} parent=39 // pred_region
        %s665 = smul.u32 2, %s25
      $region48: #{tpu_custom_call.1} parent=39 // pred_fallthru
        _
    $region40: #{tpu_custom_call.1} parent=5 // pred_fallthru
      _
    %p666 = scmp.le.s32.totalorder 2, %s13
    // Predicated region
    $region49: #{tpu_custom_call.1} parent=5 // pred_check
      %p667 = pneg %p666
    $region50: #{tpu_custom_call.1} parent=5 // pred_check_branch
      %669 = sbr.rel (%p667) target = $region52
    $region51: #{tpu_custom_call.1} parent=5 // pred_region
      %s670 = ssub.s32 %s13, 2
      // Predicated region
      $region53: #{tpu_custom_call.1} parent=51 // pred_check
        %p671 = pneg %p201
      $region54: #{tpu_custom_call.1} parent=51 // pred_check_branch
        %673 = sbr.rel (%p671) target = $region56
      $region55: #{tpu_custom_call.1} parent=51 // pred_region
        %s674 = smul.u32 2, %s28
        %p675 = scmp.lt.s32.totalorder %s26, 1
        %s676 = scalar_select %p675, %s26, 1
        %p677 = scmp.lt.s32.totalorder %s27, 1
        %s678 = scalar_select %p677, %s27, 1
        %p679 = scmp.lt.s32.totalorder %s674, 1
        %s680 = scalar_select %p679, %s674, 1
        %s681 = smul.addr %s678, 2
        %s682 = sadd.s32 %s680, %s681
        %s683 = smul.addr %s676, 4
        %s684 = sadd.s32 %s682, %s683
        %s685 = smul.addr %s684, 4
        %s686 = scalar_lea.vmem %s5, %s685
      $region56: #{tpu_custom_call.1} parent=51 // pred_fallthru
        _
      // Predicated region
      $region57: #{tpu_custom_call.1} parent=51 // pred_check
        %p687 = pneg %p231
      $region58: #{tpu_custom_call.1} parent=51 // pred_check_branch
        %689 = sbr.rel (%p687) target = $region60
      $region59: #{tpu_custom_call.1} parent=51 // pred_region
        %s690 = smul.u32 2, %s28
        %p691 = scmp.lt.s32.totalorder %s26, 1
        %s692 = scalar_select %p691, %s26, 1
        %p693 = scmp.lt.s32.totalorder %s27, 1
        %s694 = scalar_select %p693, %s27, 1
        %p695 = scmp.lt.s32.totalorder %s690, 1
        %s696 = scalar_select %p695, %s690, 1
        %s697 = smul.addr %s694, 2
        %s698 = sadd.s32 %s696, %s697
        %s699 = smul.addr %s692, 4
        %s700 = sadd.s32 %s698, %s699
        %s701 = smul.addr %s700, 4
        %s702 = scalar_lea.vmem %s6, %s701
      $region60: #{tpu_custom_call.1} parent=51 // pred_fallthru
        _
    $region52: #{tpu_custom_call.1} parent=5 // pred_fallthru
      _
  $region6: #{tpu_custom_call.1} parent=0 // loop_footer
    %s17 = sadd.s32 1, %s13
  $region7: #{tpu_custom_call.1} parent=0 // loop_footer_branch
    %12 = sbr.rel target = $region3
  $region8: #{tpu_custom_call.1} parent=0 // loop_exit
    _

</llo_original>
